<compile_context>
chip_gen: v5e
topology: v5e:2x2
jax: 0.10.0
libtpu: 0.0.40
codegen_flags: <defaults>
</compile_context>

<pallas_src>
import functools
import math

import jax
import jax.numpy as jnp
from jax.experimental import pallas as pl
from jax.experimental.pallas import tpu as pltpu

LN_EPS = 1e-5


def _layernorm(x, w, b):
    mu = jnp.mean(x, axis=-1, keepdims=True)
    var = jnp.mean((x - mu) * (x - mu), axis=-1, keepdims=True)
    return (x - mu) * jax.lax.rsqrt(var + LN_EPS) * w + b


def cross_attention_kernel(
    xq_ref, xkv_ref,
    qn_w_ref, qn_b_ref, kn_w_ref, kn_b_ref,
    wqT_ref, bq_ref, wkvT_ref, bkv_ref, woT_ref, bo_ref,
    out_ref,
    *, num_heads: int, head_dim: int, block_b: int, lq: int, lkv: int,
):
    eq = num_heads * head_dim

    xq = xq_ref[...].astype(jnp.float32)    # (block_b*lq, Eq)
    xkv = xkv_ref[...].astype(jnp.float32)  # (block_b*lkv, Ekv)

    # LayerNorms in f32 (weights are (1, E) and broadcast over rows).
    q_in = _layernorm(xq, qn_w_ref[...], qn_b_ref[...])
    kv_in = _layernorm(xkv, kn_w_ref[...], kn_b_ref[...])

    # Projections: bf16 operands, f32 accumulation.  Weights arrive
    # pre-transposed as (Ein, Eout); Wq/bq already carry the 1/sqrt(hd) scale;
    # K and V are fused into one (Ekv, 2*Eq) matmul.
    q_bf = q_in.astype(jnp.bfloat16)
    kv_bf = kv_in.astype(jnp.bfloat16)
    q = jnp.dot(q_bf, wqT_ref[...], preferred_element_type=jnp.float32) + bq_ref[...]
    kv = jnp.dot(kv_bf, wkvT_ref[...], preferred_element_type=jnp.float32) + bkv_ref[...]
    k = kv[:, :eq]
    v = kv[:, eq:]

    woT = woT_ref[...]  # (Eq, Eq), bf16, loaded once

    # Per-head attention, batched over the block_b batch slab.  Each head's
    # context is folded straight into the output projection (no lane concat).
    acc = jnp.zeros((block_b * lq, eq), jnp.float32)
    for h in range(num_heads):
        sl = slice(h * head_dim, (h + 1) * head_dim)
        qh = q[:, sl].astype(jnp.bfloat16).reshape(block_b, lq, head_dim)
        kh = k[:, sl].astype(jnp.bfloat16).reshape(block_b, lkv, head_dim)
        vh = v[:, sl].astype(jnp.bfloat16).reshape(block_b, lkv, head_dim)

        s = jnp.einsum('bqd,bkd->bqk', qh, kh,
                       preferred_element_type=jnp.float32)        # (Bt, Lq, Lkv)
        s = s - jnp.max(s, axis=-1, keepdims=True)
        p = jnp.exp(s)
        p = p * pl.reciprocal(jnp.sum(p, axis=-1, keepdims=True), approx=True)

        oh = jnp.einsum('bqk,bkd->bqd', p.astype(jnp.bfloat16), vh,
                        preferred_element_type=jnp.float32)       # (Bt, Lq, hd)
        oh2 = oh.reshape(block_b * lq, head_dim).astype(jnp.bfloat16)
        acc = acc + jnp.dot(oh2, woT[sl, :],
                            preferred_element_type=jnp.float32)

    out = acc + bo_ref[...]
    out_ref[...] = out.astype(out_ref.dtype)


def _pick_block_b(B: int, max_block_b: int = 8) -> int:
    """Largest divisor of B that is <= max_block_b and (when possible) keeps
    >= 2 grid steps so both v7x TensorCores get work."""
    divisors = [d for d in range(1, B + 1) if B % d == 0 and d <= max_block_b]
    multi_step = [d for d in divisors if B // d >= 2]
    return max(multi_step) if multi_step else max(divisors)


def cross_attention(x_q, x_kv, params, *, num_heads: int, block_b=None):
    B, Lq, Eq = x_q.shape
    _, Lkv, Ekv = x_kv.shape
    assert Eq % num_heads == 0
    head_dim = Eq // num_heads

    if block_b is None:
        block_b = _pick_block_b(B)
    assert B % block_b == 0
    # Block row counts must be multiples of 8 (or equal the full array).
    if block_b != B and ((block_b * Lq) % 8 != 0 or (block_b * Lkv) % 8 != 0):
        block_b = B
    n_blocks = B // block_b

    # ---- wrapper-side weight prep (free at trace time) ----
    scale = 1.0 / math.sqrt(head_dim)
    wqT = (params["wq"].T * scale).astype(jnp.bfloat16)                    # (Eq, Eq)
    bq = params["bq"] * scale                                              # (1, Eq)  f32
    wkvT = jnp.concatenate([params["wk"], params["wv"]], axis=0).T.astype(jnp.bfloat16)  # (Ekv, 2Eq)
    bkv = jnp.concatenate([params["bk"], params["bv"]], axis=-1)           # (1, 2Eq) f32
    woT = params["wo"].T.astype(jnp.bfloat16)                              # (Eq, Eq)
    bo = params["bo"]                                                      # (1, Eq)  f32

    # Flatten batch into rows: lane-friendly 2-D activation slabs.
    xq2 = x_q.reshape(B * Lq, Eq)
    xkv2 = x_kv.reshape(B * Lkv, Ekv)

    kernel = functools.partial(
        cross_attention_kernel, num_heads=num_heads, head_dim=head_dim,
        block_b=block_b, lq=Lq, lkv=Lkv)

    def full(shape):  # full, un-tiled parameter block (block index never changes)
        return pl.BlockSpec(shape, lambda b: tuple(0 for _ in shape))

    in_specs = [
        pl.BlockSpec((block_b * Lq, Eq), lambda b: (b, 0)),
        pl.BlockSpec((block_b * Lkv, Ekv), lambda b: (b, 0)),
        full((1, Eq)),        # q_norm weight
        full((1, Eq)),        # q_norm bias
        full((1, Ekv)),       # kv_norm weight
        full((1, Ekv)),       # kv_norm bias
        full((Eq, Eq)),       # WqT (pre-scaled)
        full((1, Eq)),        # bq (pre-scaled)
        full((Ekv, 2 * Eq)),  # WkvT (fused K/V)
        full((1, 2 * Eq)),    # bkv (fused)
        full((Eq, Eq)),       # WoT
        full((1, Eq)),        # bo
    ]

    out2 = pl.pallas_call(
        kernel,
        out_shape=jax.ShapeDtypeStruct((B * Lq, Eq), x_q.dtype),
        grid_spec=pltpu.PrefetchScalarGridSpec(
            num_scalar_prefetch=0,
            grid=(n_blocks,),
            in_specs=in_specs,
            out_specs=pl.BlockSpec((block_b * Lq, Eq), lambda b: (b, 0)),
        ),
        compiler_params=pltpu.CompilerParams(
            dimension_semantics=("parallel",),
            vmem_limit_bytes=32 * 1024 * 1024,
        ),
    )(
        xq2, xkv2,
        params["qn_w"], params["qn_b"], params["kn_w"], params["kn_b"],
        wqT, bq, wkvT, bkv, woT, bo,
    )
    return out2.reshape(B, Lq, Eq)


def cross_attention_reference(x_q, x_kv, params, *, num_heads: int):
    """Pure-JAX f32 reference for correctness checking."""
    Eq = x_q.shape[-1]
    head_dim = Eq // num_heads
    q_in = _layernorm(x_q, params["qn_w"][0], params["qn_b"][0])
    kv_in = _layernorm(x_kv, params["kn_w"][0], params["kn_b"][0])
    q = q_in @ params["wq"].T + params["bq"][0]
    k = kv_in @ params["wk"].T + params["bk"][0]
    v = kv_in @ params["wv"].T + params["bv"][0]
    B, Lq, _ = q.shape
    Lkv = k.shape[1]
    qh = q.reshape(B, Lq, num_heads, head_dim).transpose(0, 2, 1, 3)
    kh = k.reshape(B, Lkv, num_heads, head_dim).transpose(0, 2, 1, 3)
    vh = v.reshape(B, Lkv, num_heads, head_dim).transpose(0, 2, 1, 3)
    s = jnp.einsum("bhqd,bhkd->bhqk", qh, kh) / math.sqrt(head_dim)
    p = jax.nn.softmax(s, axis=-1)
    o = jnp.einsum("bhqk,bhkd->bhqd", p, vh)
    o = o.transpose(0, 2, 1, 3).reshape(B, Lq, Eq)
    return o @ params["wo"].T + params["bo"][0]


def init_params(key, num_q_channels, num_kv_channels):
    """Deterministic synthetic parameters matching nn.MultiheadAttention
    (kdim != embed_dim path) + two LayerNorms."""
    Eq, Ekv = num_q_channels, num_kv_channels
    keys = jax.random.split(key, 8)
    scale_q = 1.0 / math.sqrt(Eq)
    scale_kv = 1.0 / math.sqrt(Ekv)
    return {
        "qn_w": jnp.ones((1, Eq), jnp.float32),
        "qn_b": jnp.zeros((1, Eq), jnp.float32),
        "kn_w": jnp.ones((1, Ekv), jnp.float32),
        "kn_b": jnp.zeros((1, Ekv), jnp.float32),
        "wq": jax.random.uniform(keys[0], (Eq, Eq), jnp.float32, -scale_q, scale_q),
        "wk": jax.random.uniform(keys[1], (Eq, Ekv), jnp.float32, -scale_kv, scale_kv),
        "wv": jax.random.uniform(keys[2], (Eq, Ekv), jnp.float32, -scale_kv, scale_kv),
        "bq": jax.random.uniform(keys[3], (1, Eq), jnp.float32, -scale_q, scale_q),
        "bk": jax.random.uniform(keys[4], (1, Eq), jnp.float32, -scale_q, scale_q),
        "bv": jax.random.uniform(keys[5], (1, Eq), jnp.float32, -scale_q, scale_q),
        "wo": jax.random.uniform(keys[6], (Eq, Eq), jnp.float32, -scale_q, scale_q),
        "bo": jax.random.uniform(keys[7], (1, Eq), jnp.float32, -scale_q, scale_q),
    }


if __name__ == "__main__":
    # Small shapes: B=2 latent queries of length 8 with 32 channels,
    # keys/values of length 16 with 16 channels, 4 heads.
    # dropout = 0.1 in the module config, but forward runs in eval mode so
    # dropout is an identity here.
    B, Lq, Lkv = 2, 8, 16
    num_q_channels, num_kv_channels, num_heads = 32, 16, 4

    root = jax.random.PRNGKey(0)
    k_xq, k_xkv, k_params = jax.random.split(root, 3)
    x_q = jax.random.normal(k_xq, (B, Lq, num_q_channels), jnp.float32)
    x_kv = jax.random.normal(k_xkv, (B, Lkv, num_kv_channels), jnp.float32)
    params = init_params(k_params, num_q_channels, num_kv_channels)

    out = cross_attention(x_q, x_kv, params, num_heads=num_heads)
    out = jax.block_until_ready(out)

    ref = cross_attention_reference(x_q, x_kv, params, num_heads=num_heads)
    assert out.shape == (B, Lq, num_q_channels)
    # bf16 MXU operands with f32 accumulation -> looser tolerance than all-f32.
    assert jnp.allclose(out, ref, atol=3e-2, rtol=3e-2), "mismatch vs reference"

    print("KERNEL_OK")
</pallas_src>

<mosaic_0001>
module attributes {stable_mosaic.version = 11 : i64} {
  func.func @cross_attention_kernel(%arg0: i32, %arg1: memref<8x32xf32, #tpu.memory_space<vmem>>, %arg2: memref<16x16xf32, #tpu.memory_space<vmem>>, %arg3: memref<1x32xf32, #tpu.memory_space<vmem>>, %arg4: memref<1x32xf32, #tpu.memory_space<vmem>>, %arg5: memref<1x16xf32, #tpu.memory_space<vmem>>, %arg6: memref<1x16xf32, #tpu.memory_space<vmem>>, %arg7: memref<32x32xbf16, #tpu.memory_space<vmem>>, %arg8: memref<1x32xf32, #tpu.memory_space<vmem>>, %arg9: memref<16x64xbf16, #tpu.memory_space<vmem>>, %arg10: memref<1x64xf32, #tpu.memory_space<vmem>>, %arg11: memref<32x32xbf16, #tpu.memory_space<vmem>>, %arg12: memref<1x32xf32, #tpu.memory_space<vmem>>, %arg13: memref<8x32xf32, #tpu.memory_space<vmem>>) attributes {dimension_semantics = [#tpu.dimension_semantics<parallel>], iteration_bounds = array<i64: 2>, scalar_prefetch = 0 : i64, scratch_operands = 0 : i64, tpu.core_type = #tpu.core_type<tc>, window_params = [{transform_indices = @transform_0, window_bounds = array<i64: 8, 32>}, {transform_indices = @transform_1, window_bounds = array<i64: 16, 16>}, {pipeline_mode = #tpu.pipeline_mode<synchronous>, transform_indices = @transform_2, window_bounds = array<i64: 1, 32>}, {pipeline_mode = #tpu.pipeline_mode<synchronous>, transform_indices = @transform_3, window_bounds = array<i64: 1, 32>}, {pipeline_mode = #tpu.pipeline_mode<synchronous>, transform_indices = @transform_4, window_bounds = array<i64: 1, 16>}, {pipeline_mode = #tpu.pipeline_mode<synchronous>, transform_indices = @transform_5, window_bounds = array<i64: 1, 16>}, {pipeline_mode = #tpu.pipeline_mode<synchronous>, transform_indices = @transform_6, window_bounds = array<i64: 32, 32>}, {pipeline_mode = #tpu.pipeline_mode<synchronous>, transform_indices = @transform_7, window_bounds = array<i64: 1, 32>}, {pipeline_mode = #tpu.pipeline_mode<synchronous>, transform_indices = @transform_8, window_bounds = array<i64: 16, 64>}, {pipeline_mode = #tpu.pipeline_mode<synchronous>, transform_indices = @transform_9, window_bounds = array<i64: 1, 64>}, {pipeline_mode = #tpu.pipeline_mode<synchronous>, transform_indices = @transform_10, window_bounds = array<i64: 32, 32>}, {pipeline_mode = #tpu.pipeline_mode<synchronous>, transform_indices = @transform_11, window_bounds = array<i64: 1, 32>}, {transform_indices = @transform_12, window_bounds = array<i64: 8, 32>}]} {
    %c0 = arith.constant 0 : index
    %c0_0 = arith.constant 0 : index
    %0 = vector.load %arg1[%c0, %c0_0] : memref<8x32xf32, #tpu.memory_space<vmem>>, vector<8x32xf32>
    %c0_1 = arith.constant 0 : index
    %c0_2 = arith.constant 0 : index
    %1 = vector.load %arg2[%c0_1, %c0_2] : memref<16x16xf32, #tpu.memory_space<vmem>>, vector<16x16xf32>
    %c0_3 = arith.constant 0 : index
    %c0_4 = arith.constant 0 : index
    %2 = vector.load %arg3[%c0_3, %c0_4] : memref<1x32xf32, #tpu.memory_space<vmem>>, vector<1x32xf32>
    %c0_5 = arith.constant 0 : index
    %c0_6 = arith.constant 0 : index
    %3 = vector.load %arg4[%c0_5, %c0_6] : memref<1x32xf32, #tpu.memory_space<vmem>>, vector<1x32xf32>
    %cst = arith.constant dense<0.000000e+00> : vector<8xf32>
    %4 = vector.multi_reduction <add>, %0, %cst [1] : vector<8x32xf32> to vector<8xf32>
    %5 = vector.shape_cast %4 : vector<8xf32> to vector<8x1xf32>
    %cst_7 = arith.constant 3.200000e+01 : f32
    %6 = vector.broadcast %cst_7 : f32 to vector<8x1xf32>
    %7 = arith.divf %5, %6 : vector<8x1xf32>
    %8 = vector.broadcast %7 : vector<8x1xf32> to vector<8x32xf32>
    %9 = arith.subf %0, %8 : vector<8x32xf32>
    %10 = vector.broadcast %7 : vector<8x1xf32> to vector<8x32xf32>
    %11 = arith.subf %0, %10 : vector<8x32xf32>
    %12 = arith.mulf %9, %11 : vector<8x32xf32>
    %cst_8 = arith.constant dense<0.000000e+00> : vector<8xf32>
    %13 = vector.multi_reduction <add>, %12, %cst_8 [1] : vector<8x32xf32> to vector<8xf32>
    %14 = vector.shape_cast %13 : vector<8xf32> to vector<8x1xf32>
    %cst_9 = arith.constant 3.200000e+01 : f32
    %15 = vector.broadcast %cst_9 : f32 to vector<8x1xf32>
    %16 = arith.divf %14, %15 : vector<8x1xf32>
    %17 = vector.broadcast %7 : vector<8x1xf32> to vector<8x32xf32>
    %18 = arith.subf %0, %17 : vector<8x32xf32>
    %cst_10 = arith.constant 9.99999974E-6 : f32
    %19 = vector.broadcast %cst_10 : f32 to vector<8x1xf32>
    %20 = arith.addf %16, %19 : vector<8x1xf32>
    %21 = math.rsqrt %20 : vector<8x1xf32>
    %22 = vector.broadcast %21 : vector<8x1xf32> to vector<8x32xf32>
    %23 = arith.mulf %18, %22 : vector<8x32xf32>
    %24 = vector.broadcast %2 : vector<1x32xf32> to vector<8x32xf32>
    %25 = arith.mulf %23, %24 : vector<8x32xf32>
    %26 = vector.broadcast %3 : vector<1x32xf32> to vector<8x32xf32>
    %27 = arith.addf %25, %26 : vector<8x32xf32>
    %c0_11 = arith.constant 0 : index
    %c0_12 = arith.constant 0 : index
    %28 = vector.load %arg5[%c0_11, %c0_12] : memref<1x16xf32, #tpu.memory_space<vmem>>, vector<1x16xf32>
    %c0_13 = arith.constant 0 : index
    %c0_14 = arith.constant 0 : index
    %29 = vector.load %arg6[%c0_13, %c0_14] : memref<1x16xf32, #tpu.memory_space<vmem>>, vector<1x16xf32>
    %cst_15 = arith.constant dense<0.000000e+00> : vector<16xf32>
    %30 = vector.multi_reduction <add>, %1, %cst_15 [1] : vector<16x16xf32> to vector<16xf32>
    %31 = vector.shape_cast %30 : vector<16xf32> to vector<16x1xf32>
    %cst_16 = arith.constant 1.600000e+01 : f32
    %32 = vector.broadcast %cst_16 : f32 to vector<16x1xf32>
    %33 = arith.divf %31, %32 : vector<16x1xf32>
    %34 = vector.broadcast %33 : vector<16x1xf32> to vector<16x16xf32>
    %35 = arith.subf %1, %34 : vector<16x16xf32>
    %36 = vector.broadcast %33 : vector<16x1xf32> to vector<16x16xf32>
    %37 = arith.subf %1, %36 : vector<16x16xf32>
    %38 = arith.mulf %35, %37 : vector<16x16xf32>
    %cst_17 = arith.constant dense<0.000000e+00> : vector<16xf32>
    %39 = vector.multi_reduction <add>, %38, %cst_17 [1] : vector<16x16xf32> to vector<16xf32>
    %40 = vector.shape_cast %39 : vector<16xf32> to vector<16x1xf32>
    %cst_18 = arith.constant 1.600000e+01 : f32
    %41 = vector.broadcast %cst_18 : f32 to vector<16x1xf32>
    %42 = arith.divf %40, %41 : vector<16x1xf32>
    %43 = vector.broadcast %33 : vector<16x1xf32> to vector<16x16xf32>
    %44 = arith.subf %1, %43 : vector<16x16xf32>
    %cst_19 = arith.constant 9.99999974E-6 : f32
    %45 = vector.broadcast %cst_19 : f32 to vector<16x1xf32>
    %46 = arith.addf %42, %45 : vector<16x1xf32>
    %47 = math.rsqrt %46 : vector<16x1xf32>
    %48 = vector.broadcast %47 : vector<16x1xf32> to vector<16x16xf32>
    %49 = arith.mulf %44, %48 : vector<16x16xf32>
    %50 = vector.broadcast %28 : vector<1x16xf32> to vector<16x16xf32>
    %51 = arith.mulf %49, %50 : vector<16x16xf32>
    %52 = vector.broadcast %29 : vector<1x16xf32> to vector<16x16xf32>
    %53 = arith.addf %51, %52 : vector<16x16xf32>
    %54 = arith.truncf %27 : vector<8x32xf32> to vector<8x32xbf16>
    %55 = arith.truncf %53 : vector<16x16xf32> to vector<16x16xbf16>
    %c0_20 = arith.constant 0 : index
    %c0_21 = arith.constant 0 : index
    %56 = vector.load %arg7[%c0_20, %c0_21] : memref<32x32xbf16, #tpu.memory_space<vmem>>, vector<32x32xbf16>
    %cst_22 = arith.constant dense<0.000000e+00> : vector<8x32xf32>
    %57 = tpu.matmul %54, %56, %cst_22 {dimension_numbers = #tpu.dot_dimension_numbers<[1], [0], [0], [1], [0, 0, 1, 1], [], []>} : vector<8x32xbf16>, vector<32x32xbf16>, vector<8x32xf32> -> vector<8x32xf32>
    %c0_23 = arith.constant 0 : index
    %c0_24 = arith.constant 0 : index
    %58 = vector.load %arg8[%c0_23, %c0_24] : memref<1x32xf32, #tpu.memory_space<vmem>>, vector<1x32xf32>
    %59 = vector.broadcast %58 : vector<1x32xf32> to vector<8x32xf32>
    %60 = arith.addf %57, %59 : vector<8x32xf32>
    %c0_25 = arith.constant 0 : index
    %c0_26 = arith.constant 0 : index
    %61 = vector.load %arg9[%c0_25, %c0_26] : memref<16x64xbf16, #tpu.memory_space<vmem>>, vector<16x64xbf16>
    %cst_27 = arith.constant dense<0.000000e+00> : vector<16x64xf32>
    %62 = tpu.matmul %55, %61, %cst_27 {dimension_numbers = #tpu.dot_dimension_numbers<[1], [0], [0], [1], [0, 0, 1, 1], [], []>} : vector<16x16xbf16>, vector<16x64xbf16>, vector<16x64xf32> -> vector<16x64xf32>
    %c0_28 = arith.constant 0 : index
    %c0_29 = arith.constant 0 : index
    %63 = vector.load %arg10[%c0_28, %c0_29] : memref<1x64xf32, #tpu.memory_space<vmem>>, vector<1x64xf32>
    %64 = vector.broadcast %63 : vector<1x64xf32> to vector<16x64xf32>
    %65 = arith.addf %62, %64 : vector<16x64xf32>
    %66 = vector.extract_strided_slice %65 {offsets = [0, 0], sizes = [16, 32], strides = [1, 1]} : vector<16x64xf32> to vector<16x32xf32>
    %67 = vector.extract_strided_slice %65 {offsets = [0, 32], sizes = [16, 32], strides = [1, 1]} : vector<16x64xf32> to vector<16x32xf32>
    %c0_30 = arith.constant 0 : index
    %c0_31 = arith.constant 0 : index
    %68 = vector.load %arg11[%c0_30, %c0_31] : memref<32x32xbf16, #tpu.memory_space<vmem>>, vector<32x32xbf16>
    %cst_32 = arith.constant 0.000000e+00 : f32
    %69 = vector.broadcast %cst_32 : f32 to vector<8x32xf32>
    %70 = vector.extract_strided_slice %60 {offsets = [0, 0], sizes = [8, 8], strides = [1, 1]} : vector<8x32xf32> to vector<8x8xf32>
    %71 = arith.truncf %70 : vector<8x8xf32> to vector<8x8xbf16>
    %72 = vector.shape_cast %71 : vector<8x8xbf16> to vector<1x8x8xbf16>
    %73 = vector.extract_strided_slice %66 {offsets = [0, 0], sizes = [16, 8], strides = [1, 1]} : vector<16x32xf32> to vector<16x8xf32>
    %74 = arith.truncf %73 : vector<16x8xf32> to vector<16x8xbf16>
    %75 = vector.shape_cast %74 : vector<16x8xbf16> to vector<1x16x8xbf16>
    %76 = vector.extract_strided_slice %67 {offsets = [0, 0], sizes = [16, 8], strides = [1, 1]} : vector<16x32xf32> to vector<16x8xf32>
    %77 = arith.truncf %76 : vector<16x8xf32> to vector<16x8xbf16>
    %78 = vector.shape_cast %77 : vector<16x8xbf16> to vector<1x16x8xbf16>
    "tpu.trace_start"() <{level = 10 : i32, message = "bqd,bkd->bqk"}> : () -> ()
    %cst_33 = arith.constant dense<0.000000e+00> : vector<1x8x16xf32>
    %79 = tpu.matmul %72, %75, %cst_33 {dimension_numbers = #tpu.dot_dimension_numbers<[2], [2], [1], [1], [0, 0, 0, 1, 1, 1], [0], [0]>} : vector<1x8x8xbf16>, vector<1x16x8xbf16>, vector<1x8x16xf32> -> vector<1x8x16xf32>
    "tpu.trace_stop"() : () -> ()
    %cst_34 = arith.constant dense<0xFF800000> : vector<1x8xf32>
    %80 = vector.multi_reduction <maximumf>, %79, %cst_34 [2] : vector<1x8x16xf32> to vector<1x8xf32>
    %81 = vector.shape_cast %80 : vector<1x8xf32> to vector<1x8x1xf32>
    %82 = vector.broadcast %81 : vector<1x8x1xf32> to vector<1x8x16xf32>
    %83 = arith.subf %79, %82 : vector<1x8x16xf32>
    %84 = math.exp %83 : vector<1x8x16xf32>
    %cst_35 = arith.constant dense<0.000000e+00> : vector<1x8xf32>
    %85 = vector.multi_reduction <add>, %84, %cst_35 [2] : vector<1x8x16xf32> to vector<1x8xf32>
    %86 = vector.shape_cast %85 : vector<1x8xf32> to vector<1x8x1xf32>
    %87 = tpu.reciprocal %86 {approx = true} : vector<1x8x1xf32> -> vector<1x8x1xf32>
    %88 = vector.broadcast %87 : vector<1x8x1xf32> to vector<1x8x16xf32>
    %89 = arith.mulf %84, %88 : vector<1x8x16xf32>
    %90 = arith.truncf %89 : vector<1x8x16xf32> to vector<1x8x16xbf16>
    "tpu.trace_start"() <{level = 10 : i32, message = "bqk,bkd->bqd"}> : () -> ()
    %cst_36 = arith.constant dense<0.000000e+00> : vector<1x8x8xf32>
    %91 = tpu.matmul %90, %78, %cst_36 {dimension_numbers = #tpu.dot_dimension_numbers<[2], [1], [1], [2], [0, 0, 0, 1, 1, 2], [0], [0]>} : vector<1x8x16xbf16>, vector<1x16x8xbf16>, vector<1x8x8xf32> -> vector<1x8x8xf32>
    "tpu.trace_stop"() : () -> ()
    %92 = vector.shape_cast %91 : vector<1x8x8xf32> to vector<8x8xf32>
    %93 = arith.truncf %92 : vector<8x8xf32> to vector<8x8xbf16>
    %94 = vector.extract_strided_slice %68 {offsets = [0, 0], sizes = [8, 32], strides = [1, 1]} : vector<32x32xbf16> to vector<8x32xbf16>
    %cst_37 = arith.constant dense<0.000000e+00> : vector<8x32xf32>
    %95 = tpu.matmul %93, %94, %cst_37 {dimension_numbers = #tpu.dot_dimension_numbers<[1], [0], [0], [1], [0, 0, 1, 1], [], []>} : vector<8x8xbf16>, vector<8x32xbf16>, vector<8x32xf32> -> vector<8x32xf32>
    %96 = arith.addf %69, %95 : vector<8x32xf32>
    %97 = vector.extract_strided_slice %60 {offsets = [0, 8], sizes = [8, 8], strides = [1, 1]} : vector<8x32xf32> to vector<8x8xf32>
    %98 = arith.truncf %97 : vector<8x8xf32> to vector<8x8xbf16>
    %99 = vector.shape_cast %98 : vector<8x8xbf16> to vector<1x8x8xbf16>
    %100 = vector.extract_strided_slice %66 {offsets = [0, 8], sizes = [16, 8], strides = [1, 1]} : vector<16x32xf32> to vector<16x8xf32>
    %101 = arith.truncf %100 : vector<16x8xf32> to vector<16x8xbf16>
    %102 = vector.shape_cast %101 : vector<16x8xbf16> to vector<1x16x8xbf16>
    %103 = vector.extract_strided_slice %67 {offsets = [0, 8], sizes = [16, 8], strides = [1, 1]} : vector<16x32xf32> to vector<16x8xf32>
    %104 = arith.truncf %103 : vector<16x8xf32> to vector<16x8xbf16>
    %105 = vector.shape_cast %104 : vector<16x8xbf16> to vector<1x16x8xbf16>
    "tpu.trace_start"() <{level = 10 : i32, message = "bqd,bkd->bqk"}> : () -> ()
    %cst_38 = arith.constant dense<0.000000e+00> : vector<1x8x16xf32>
    %106 = tpu.matmul %99, %102, %cst_38 {dimension_numbers = #tpu.dot_dimension_numbers<[2], [2], [1], [1], [0, 0, 0, 1, 1, 1], [0], [0]>} : vector<1x8x8xbf16>, vector<1x16x8xbf16>, vector<1x8x16xf32> -> vector<1x8x16xf32>
    "tpu.trace_stop"() : () -> ()
    %cst_39 = arith.constant dense<0xFF800000> : vector<1x8xf32>
    %107 = vector.multi_reduction <maximumf>, %106, %cst_39 [2] : vector<1x8x16xf32> to vector<1x8xf32>
    %108 = vector.shape_cast %107 : vector<1x8xf32> to vector<1x8x1xf32>
    %109 = vector.broadcast %108 : vector<1x8x1xf32> to vector<1x8x16xf32>
    %110 = arith.subf %106, %109 : vector<1x8x16xf32>
    %111 = math.exp %110 : vector<1x8x16xf32>
    %cst_40 = arith.constant dense<0.000000e+00> : vector<1x8xf32>
    %112 = vector.multi_reduction <add>, %111, %cst_40 [2] : vector<1x8x16xf32> to vector<1x8xf32>
    %113 = vector.shape_cast %112 : vector<1x8xf32> to vector<1x8x1xf32>
    %114 = tpu.reciprocal %113 {approx = true} : vector<1x8x1xf32> -> vector<1x8x1xf32>
    %115 = vector.broadcast %114 : vector<1x8x1xf32> to vector<1x8x16xf32>
    %116 = arith.mulf %111, %115 : vector<1x8x16xf32>
    %117 = arith.truncf %116 : vector<1x8x16xf32> to vector<1x8x16xbf16>
    "tpu.trace_start"() <{level = 10 : i32, message = "bqk,bkd->bqd"}> : () -> ()
    %cst_41 = arith.constant dense<0.000000e+00> : vector<1x8x8xf32>
    %118 = tpu.matmul %117, %105, %cst_41 {dimension_numbers = #tpu.dot_dimension_numbers<[2], [1], [1], [2], [0, 0, 0, 1, 1, 2], [0], [0]>} : vector<1x8x16xbf16>, vector<1x16x8xbf16>, vector<1x8x8xf32> -> vector<1x8x8xf32>
    "tpu.trace_stop"() : () -> ()
    %119 = vector.shape_cast %118 : vector<1x8x8xf32> to vector<8x8xf32>
    %120 = arith.truncf %119 : vector<8x8xf32> to vector<8x8xbf16>
    %121 = vector.extract_strided_slice %68 {offsets = [8, 0], sizes = [8, 32], strides = [1, 1]} : vector<32x32xbf16> to vector<8x32xbf16>
    %cst_42 = arith.constant dense<0.000000e+00> : vector<8x32xf32>
    %122 = tpu.matmul %120, %121, %cst_42 {dimension_numbers = #tpu.dot_dimension_numbers<[1], [0], [0], [1], [0, 0, 1, 1], [], []>} : vector<8x8xbf16>, vector<8x32xbf16>, vector<8x32xf32> -> vector<8x32xf32>
    %123 = arith.addf %96, %122 : vector<8x32xf32>
    %124 = vector.extract_strided_slice %60 {offsets = [0, 16], sizes = [8, 8], strides = [1, 1]} : vector<8x32xf32> to vector<8x8xf32>
    %125 = arith.truncf %124 : vector<8x8xf32> to vector<8x8xbf16>
    %126 = vector.shape_cast %125 : vector<8x8xbf16> to vector<1x8x8xbf16>
    %127 = vector.extract_strided_slice %66 {offsets = [0, 16], sizes = [16, 8], strides = [1, 1]} : vector<16x32xf32> to vector<16x8xf32>
    %128 = arith.truncf %127 : vector<16x8xf32> to vector<16x8xbf16>
    %129 = vector.shape_cast %128 : vector<16x8xbf16> to vector<1x16x8xbf16>
    %130 = vector.extract_strided_slice %67 {offsets = [0, 16], sizes = [16, 8], strides = [1, 1]} : vector<16x32xf32> to vector<16x8xf32>
    %131 = arith.truncf %130 : vector<16x8xf32> to vector<16x8xbf16>
    %132 = vector.shape_cast %131 : vector<16x8xbf16> to vector<1x16x8xbf16>
    "tpu.trace_start"() <{level = 10 : i32, message = "bqd,bkd->bqk"}> : () -> ()
    %cst_43 = arith.constant dense<0.000000e+00> : vector<1x8x16xf32>
    %133 = tpu.matmul %126, %129, %cst_43 {dimension_numbers = #tpu.dot_dimension_numbers<[2], [2], [1], [1], [0, 0, 0, 1, 1, 1], [0], [0]>} : vector<1x8x8xbf16>, vector<1x16x8xbf16>, vector<1x8x16xf32> -> vector<1x8x16xf32>
    "tpu.trace_stop"() : () -> ()
    %cst_44 = arith.constant dense<0xFF800000> : vector<1x8xf32>
    %134 = vector.multi_reduction <maximumf>, %133, %cst_44 [2] : vector<1x8x16xf32> to vector<1x8xf32>
    %135 = vector.shape_cast %134 : vector<1x8xf32> to vector<1x8x1xf32>
    %136 = vector.broadcast %135 : vector<1x8x1xf32> to vector<1x8x16xf32>
    %137 = arith.subf %133, %136 : vector<1x8x16xf32>
    %138 = math.exp %137 : vector<1x8x16xf32>
    %cst_45 = arith.constant dense<0.000000e+00> : vector<1x8xf32>
    %139 = vector.multi_reduction <add>, %138, %cst_45 [2] : vector<1x8x16xf32> to vector<1x8xf32>
    %140 = vector.shape_cast %139 : vector<1x8xf32> to vector<1x8x1xf32>
    %141 = tpu.reciprocal %140 {approx = true} : vector<1x8x1xf32> -> vector<1x8x1xf32>
    %142 = vector.broadcast %141 : vector<1x8x1xf32> to vector<1x8x16xf32>
    %143 = arith.mulf %138, %142 : vector<1x8x16xf32>
    %144 = arith.truncf %143 : vector<1x8x16xf32> to vector<1x8x16xbf16>
    "tpu.trace_start"() <{level = 10 : i32, message = "bqk,bkd->bqd"}> : () -> ()
    %cst_46 = arith.constant dense<0.000000e+00> : vector<1x8x8xf32>
    %145 = tpu.matmul %144, %132, %cst_46 {dimension_numbers = #tpu.dot_dimension_numbers<[2], [1], [1], [2], [0, 0, 0, 1, 1, 2], [0], [0]>} : vector<1x8x16xbf16>, vector<1x16x8xbf16>, vector<1x8x8xf32> -> vector<1x8x8xf32>
    "tpu.trace_stop"() : () -> ()
    %146 = vector.shape_cast %145 : vector<1x8x8xf32> to vector<8x8xf32>
    %147 = arith.truncf %146 : vector<8x8xf32> to vector<8x8xbf16>
    %148 = vector.extract_strided_slice %68 {offsets = [16, 0], sizes = [8, 32], strides = [1, 1]} : vector<32x32xbf16> to vector<8x32xbf16>
    %cst_47 = arith.constant dense<0.000000e+00> : vector<8x32xf32>
    %149 = tpu.matmul %147, %148, %cst_47 {dimension_numbers = #tpu.dot_dimension_numbers<[1], [0], [0], [1], [0, 0, 1, 1], [], []>} : vector<8x8xbf16>, vector<8x32xbf16>, vector<8x32xf32> -> vector<8x32xf32>
    %150 = arith.addf %123, %149 : vector<8x32xf32>
    %151 = vector.extract_strided_slice %60 {offsets = [0, 24], sizes = [8, 8], strides = [1, 1]} : vector<8x32xf32> to vector<8x8xf32>
    %152 = arith.truncf %151 : vector<8x8xf32> to vector<8x8xbf16>
    %153 = vector.shape_cast %152 : vector<8x8xbf16> to vector<1x8x8xbf16>
    %154 = vector.extract_strided_slice %66 {offsets = [0, 24], sizes = [16, 8], strides = [1, 1]} : vector<16x32xf32> to vector<16x8xf32>
    %155 = arith.truncf %154 : vector<16x8xf32> to vector<16x8xbf16>
    %156 = vector.shape_cast %155 : vector<16x8xbf16> to vector<1x16x8xbf16>
    %157 = vector.extract_strided_slice %67 {offsets = [0, 24], sizes = [16, 8], strides = [1, 1]} : vector<16x32xf32> to vector<16x8xf32>
    %158 = arith.truncf %157 : vector<16x8xf32> to vector<16x8xbf16>
    %159 = vector.shape_cast %158 : vector<16x8xbf16> to vector<1x16x8xbf16>
    "tpu.trace_start"() <{level = 10 : i32, message = "bqd,bkd->bqk"}> : () -> ()
    %cst_48 = arith.constant dense<0.000000e+00> : vector<1x8x16xf32>
    %160 = tpu.matmul %153, %156, %cst_48 {dimension_numbers = #tpu.dot_dimension_numbers<[2], [2], [1], [1], [0, 0, 0, 1, 1, 1], [0], [0]>} : vector<1x8x8xbf16>, vector<1x16x8xbf16>, vector<1x8x16xf32> -> vector<1x8x16xf32>
    "tpu.trace_stop"() : () -> ()
    %cst_49 = arith.constant dense<0xFF800000> : vector<1x8xf32>
    %161 = vector.multi_reduction <maximumf>, %160, %cst_49 [2] : vector<1x8x16xf32> to vector<1x8xf32>
    %162 = vector.shape_cast %161 : vector<1x8xf32> to vector<1x8x1xf32>
    %163 = vector.broadcast %162 : vector<1x8x1xf32> to vector<1x8x16xf32>
    %164 = arith.subf %160, %163 : vector<1x8x16xf32>
    %165 = math.exp %164 : vector<1x8x16xf32>
    %cst_50 = arith.constant dense<0.000000e+00> : vector<1x8xf32>
    %166 = vector.multi_reduction <add>, %165, %cst_50 [2] : vector<1x8x16xf32> to vector<1x8xf32>
    %167 = vector.shape_cast %166 : vector<1x8xf32> to vector<1x8x1xf32>
    %168 = tpu.reciprocal %167 {approx = true} : vector<1x8x1xf32> -> vector<1x8x1xf32>
    %169 = vector.broadcast %168 : vector<1x8x1xf32> to vector<1x8x16xf32>
    %170 = arith.mulf %165, %169 : vector<1x8x16xf32>
    %171 = arith.truncf %170 : vector<1x8x16xf32> to vector<1x8x16xbf16>
    "tpu.trace_start"() <{level = 10 : i32, message = "bqk,bkd->bqd"}> : () -> ()
    %cst_51 = arith.constant dense<0.000000e+00> : vector<1x8x8xf32>
    %172 = tpu.matmul %171, %159, %cst_51 {dimension_numbers = #tpu.dot_dimension_numbers<[2], [1], [1], [2], [0, 0, 0, 1, 1, 2], [0], [0]>} : vector<1x8x16xbf16>, vector<1x16x8xbf16>, vector<1x8x8xf32> -> vector<1x8x8xf32>
    "tpu.trace_stop"() : () -> ()
    %173 = vector.shape_cast %172 : vector<1x8x8xf32> to vector<8x8xf32>
    %174 = arith.truncf %173 : vector<8x8xf32> to vector<8x8xbf16>
    %175 = vector.extract_strided_slice %68 {offsets = [24, 0], sizes = [8, 32], strides = [1, 1]} : vector<32x32xbf16> to vector<8x32xbf16>
    %cst_52 = arith.constant dense<0.000000e+00> : vector<8x32xf32>
    %176 = tpu.matmul %174, %175, %cst_52 {dimension_numbers = #tpu.dot_dimension_numbers<[1], [0], [0], [1], [0, 0, 1, 1], [], []>} : vector<8x8xbf16>, vector<8x32xbf16>, vector<8x32xf32> -> vector<8x32xf32>
    %177 = arith.addf %150, %176 : vector<8x32xf32>
    %c0_53 = arith.constant 0 : index
    %c0_54 = arith.constant 0 : index
    %178 = vector.load %arg12[%c0_53, %c0_54] : memref<1x32xf32, #tpu.memory_space<vmem>>, vector<1x32xf32>
    %179 = vector.broadcast %178 : vector<1x32xf32> to vector<8x32xf32>
    %180 = arith.addf %177, %179 : vector<8x32xf32>
    %c0_55 = arith.constant 0 : index
    %c0_56 = arith.constant 0 : index
    %181 = vector.load %arg13[%c0_55, %c0_56] : memref<8x32xf32, #tpu.memory_space<vmem>>, vector<8x32xf32>
    tpu.vector_store %arg13[%c0_55, %c0_56], %180 {strides = array<i32>} : memref<8x32xf32, #tpu.memory_space<vmem>>, vector<8x32xf32>,
    return
  }
  func.func @transform_0(%arg0: i32) -> (i32, i32) {
    %c0_i32 = arith.constant 0 : i32
    %c0_i32_0 = arith.constant 0 : i32
    return %arg0, %c0_i32 : i32, i32
  }
  func.func @transform_1(%arg0: i32) -> (i32, i32) {
    %c0_i32 = arith.constant 0 : i32
    %c0_i32_0 = arith.constant 0 : i32
    return %arg0, %c0_i32 : i32, i32
  }
  func.func @transform_2(%arg0: i32) -> (i32, i32) {
    %c0_i32 = arith.constant 0 : i32
    %c0_i32_0 = arith.constant 0 : i32
    %c0_i32_1 = arith.constant 0 : i32
    return %c0_i32, %c0_i32_0 : i32, i32
  }
  func.func @transform_3(%arg0: i32) -> (i32, i32) {
    %c0_i32 = arith.constant 0 : i32
    %c0_i32_0 = arith.constant 0 : i32
    %c0_i32_1 = arith.constant 0 : i32
    return %c0_i32, %c0_i32_0 : i32, i32
  }
  func.func @transform_4(%arg0: i32) -> (i32, i32) {
    %c0_i32 = arith.constant 0 : i32
    %c0_i32_0 = arith.constant 0 : i32
    %c0_i32_1 = arith.constant 0 : i32
    return %c0_i32, %c0_i32_0 : i32, i32
  }
  func.func @transform_5(%arg0: i32) -> (i32, i32) {
    %c0_i32 = arith.constant 0 : i32
    %c0_i32_0 = arith.constant 0 : i32
    %c0_i32_1 = arith.constant 0 : i32
    return %c0_i32, %c0_i32_0 : i32, i32
  }
  func.func @transform_6(%arg0: i32) -> (i32, i32) {
    %c0_i32 = arith.constant 0 : i32
    %c0_i32_0 = arith.constant 0 : i32
    %c0_i32_1 = arith.constant 0 : i32
    return %c0_i32, %c0_i32_0 : i32, i32
  }
  func.func @transform_7(%arg0: i32) -> (i32, i32) {
    %c0_i32 = arith.constant 0 : i32
    %c0_i32_0 = arith.constant 0 : i32
    %c0_i32_1 = arith.constant 0 : i32
    return %c0_i32, %c0_i32_0 : i32, i32
  }
  func.func @transform_8(%arg0: i32) -> (i32, i32) {
    %c0_i32 = arith.constant 0 : i32
    %c0_i32_0 = arith.constant 0 : i32
    %c0_i32_1 = arith.constant 0 : i32
    return %c0_i32, %c0_i32_0 : i32, i32
  }
  func.func @transform_9(%arg0: i32) -> (i32, i32) {
    %c0_i32 = arith.constant 0 : i32
    %c0_i32_0 = arith.constant 0 : i32
    %c0_i32_1 = arith.constant 0 : i32
    return %c0_i32, %c0_i32_0 : i32, i32
  }
  func.func @transform_10(%arg0: i32) -> (i32, i32) {
    %c0_i32 = arith.constant 0 : i32
    %c0_i32_0 = arith.constant 0 : i32
    %c0_i32_1 = arith.constant 0 : i32
    return %c0_i32, %c0_i32_0 : i32, i32
  }
  func.func @transform_11(%arg0: i32) -> (i32, i32) {
    %c0_i32 = arith.constant 0 : i32
    %c0_i32_0 = arith.constant 0 : i32
    %c0_i32_1 = arith.constant 0 : i32
    return %c0_i32, %c0_i32_0 : i32, i32
  }
  func.func @transform_12(%arg0: i32) -> (i32, i32) {
    %c0_i32 = arith.constant 0 : i32
    %c0_i32_0 = arith.constant 0 : i32
    return %arg0, %c0_i32 : i32, i32
  }
}

</mosaic_0001>

<llo_original>
// kernel: tpu_custom_call.1
$region0: #{tpu_custom_call.1}
  #allocation0 [shape = 'u32[]', space=smem, size = 0x4, offset = 0x4, fixed_abs, tag = 'smem constant byte address 0x4 - core index']
  #allocation1 [shape = 'u32[72,128]{1,0:T(1,128)}', space=vmem, size = 0x9000, scoped, tag = 'internal scratch']
  %s0 = inlined_call_operand.vmem [shape: f32[16,32], index: 0, kind: input, shape index: {}]
  %s1 = inlined_call_operand.vmem [shape: f32[32,16], index: 1, kind: input, shape index: {}]
  %s2 = inlined_call_operand.vmem [shape: f32[1,32], index: 2, kind: input, shape index: {}]
  %s3 = inlined_call_operand.vmem [shape: f32[1,32], index: 3, kind: input, shape index: {}]
  %s4 = inlined_call_operand.vmem [shape: f32[1,16], index: 4, kind: input, shape index: {}]
  %s5 = inlined_call_operand.vmem [shape: f32[1,16], index: 5, kind: input, shape index: {}]
  %s6 = inlined_call_operand.vmem [shape: bf16[32,32], index: 6, kind: input, shape index: {}]
  %s7 = inlined_call_operand.vmem [shape: f32[1,32], index: 7, kind: input, shape index: {}]
  %s8 = inlined_call_operand.hbm [shape: bf16[16,64], index: 8, kind: input, shape index: {}]
  %s9 = inlined_call_operand.vmem [shape: f32[1,64], index: 9, kind: input, shape index: {}]
  %s10 = inlined_call_operand.vmem [shape: bf16[32,32], index: 10, kind: input, shape index: {}]
  %s11 = inlined_call_operand.vmem [shape: f32[1,32], index: 11, kind: input, shape index: {}]
  %s12 = inlined_call_operand.hbm [shape: f32[16,32], index: 12, kind: output, shape index: {}]
  %s13 = sld [smem:[#allocation0]]
  $region85: #{tpu_custom_call.1} parent=0
    _
  %s15 = ssub.s32 1, %s13
  %s16 = scalar_select 0, %s15, %s13
  $region1: #{tpu_custom_call.1} parent=0
    #allocation2 [shape = 'u8[4096]{0}', space=vmem, size = 0x1000, scoped, tag = 'input window, operand 8, single buffered']
    #allocation3 [shape = 's32[2]{0}', space=sflag, size = 0x8, scoped, tag = 'scoped memory for tpu_custom_call.1']
    #allocation4 [shape = 's32[2]{0}', space=sflag, size = 0x8, scoped, tag = 'scoped memory for tpu_custom_call.1']
    #allocation5 [shape = 'u8[8192]{0}', space=vmem, size = 0x2000, scoped, tag = 'output window, operand 0']
    %17 = vsyncpa [#allocation3], 0
    %18 = vsyncpa [#allocation4], 0
    %s19 = scalar_lea.sflag [#allocation4], 1
    %20 = vsyncpa %s19, 0
    loop: start=0, step=1, limit=4
    $region2: #{tpu_custom_call.1} parent=1 // loop_pre_header
      _
    $region3: #{tpu_custom_call.1} parent=1 // loop_header
      %s22 = sphi 0, %s26
      %p23 = scmp.ge.s32.totalorder %s22, 4
      %s32 = sphi 0, %s34
      %s35 = sphi 0, %s32
      %s36 = sphi 0, %s35
      %s52 = sphi 0, %s36
      %s58 = sphi 0, %s60
      %s61 = sphi 0, %s58
      %s62 = sphi 0, %s61
      %s78 = sphi 0, %s62
      %s82 = sphi 0, %s82
      %s84 = sphi 0, %s82
      %s85 = sphi 0, %s84
      %s99 = sphi 0, %s85
      %s103 = sphi 0, %s103
      %s105 = sphi 0, %s103
      %s106 = sphi 0, %s105
      %s120 = sphi 0, %s106
      %s124 = sphi 0, %s124
      %s126 = sphi 0, %s124
      %s127 = sphi 0, %s126
      %s141 = sphi 0, %s127
      %s145 = sphi 0, %s145
      %s147 = sphi 0, %s145
      %s148 = sphi 0, %s147
      %s162 = sphi 0, %s148
      %s166 = sphi 0, %s166
      %s168 = sphi 0, %s166
      %s169 = sphi 0, %s168
      %s183 = sphi 0, %s169
      %s187 = sphi 0, %s187
      %s189 = sphi 0, %s187
      %s190 = sphi 0, %s189
      %s204 = sphi 0, %s190
      %s208 = sphi 0, %s208
      %s210 = sphi 0, %s208
      %s211 = sphi 0, %s210
      %s225 = sphi 0, %s211
      %s229 = sphi 0, %s229
      %s231 = sphi 0, %s229
      %s232 = sphi 0, %s231
      %s246 = sphi 0, %s232
      %s250 = sphi 0, %s250
      %s252 = sphi 0, %s250
      %s253 = sphi 0, %s252
      %s267 = sphi 0, %s253
      %s271 = sphi 0, %s271
      %s273 = sphi 0, %s271
      %s274 = sphi 0, %s273
      %s288 = sphi 0, %s274
      %s294 = sphi 0, %s296
      %s297 = sphi 0, %s294
      %s298 = sphi 0, %s297
      %s314 = sphi 0, %s298
    $region4: #{tpu_custom_call.1} parent=1 // loop_header_branch
      %25 = sbr.rel (%p23) target = $region8
    $region5: #{tpu_custom_call.1} parent=1 // loop_body
      %s27 = ssub.s32 %s22, 1
      %s28 = ssub.s32 %s22, 2
      %s29 = sadd.s32 %s22, 1
      %s30 = ssub.s32 %s22, %s29
      %p31 = scmp.eq.s32.totalorder %s30, 0
      %s33 = sadd.s32 %s32, 1
      %s34 = scalar_select %p31, %s32, %s33
      %p37 = pneg %p31
      %p38 = scmp.eq.s32.totalorder %s22, 1
      %p39 = por %p37, %p38
      %p40 = scmp.ne.s32.totalorder %s32, %s35
      %p41 = scmp.eq.s32.totalorder %s22, 0
      %p42 = por %p40, %p41
      %p43 = scmp.ne.s32.totalorder %s32, %s35
      %p44 = scmp.eq.s32.totalorder %s27, 1
      %p45 = por %p43, %p44
      %p46 = scmp.ne.s32.totalorder %s35, %s36
      %p47 = scmp.eq.s32.totalorder %s27, 0
      %p48 = por %p46, %p47
      %p49 = scmp.ne.s32.totalorder %s35, %s36
      %p50 = scmp.eq.s32.totalorder %s28, 1
      %p51 = por %p49, %p50
      %p53 = scmp.ne.s32.totalorder %s36, %s52
      %p54 = scmp.eq.s32.totalorder %s28, 0
      %p55 = por %p53, %p54
      %s56 = ssub.s32 %s22, %s29
      %p57 = scmp.eq.s32.totalorder %s56, 0
      %s59 = sadd.s32 %s58, 1
      %s60 = scalar_select %p57, %s58, %s59
      %p63 = pneg %p57
      %p64 = scmp.eq.s32.totalorder %s22, 1
      %p65 = por %p63, %p64
      %p66 = scmp.ne.s32.totalorder %s58, %s61
      %p67 = scmp.eq.s32.totalorder %s22, 0
      %p68 = por %p66, %p67
      %p69 = scmp.ne.s32.totalorder %s58, %s61
      %p70 = scmp.eq.s32.totalorder %s27, 1
      %p71 = por %p69, %p70
      %p72 = scmp.ne.s32.totalorder %s61, %s62
      %p73 = scmp.eq.s32.totalorder %s27, 0
      %p74 = por %p72, %p73
      %p75 = scmp.ne.s32.totalorder %s61, %s62
      %p76 = scmp.eq.s32.totalorder %s28, 1
      %p77 = por %p75, %p76
      %p79 = scmp.ne.s32.totalorder %s62, %s78
      %p80 = scmp.eq.s32.totalorder %s28, 0
      %p81 = por %p79, %p80
      %s83 = sadd.s32 %s82, 1
      %p86 = scmp.eq.s32.totalorder %s22, 1
      %p87 = scmp.ne.s32.totalorder %s82, %s84
      %p88 = scmp.eq.s32.totalorder %s22, 0
      %p89 = por %p87, %p88
      %p90 = scmp.ne.s32.totalorder %s82, %s84
      %p91 = scmp.eq.s32.totalorder %s27, 1
      %p92 = por %p90, %p91
      %p93 = scmp.ne.s32.totalorder %s84, %s85
      %p94 = scmp.eq.s32.totalorder %s27, 0
      %p95 = por %p93, %p94
      %p96 = scmp.ne.s32.totalorder %s84, %s85
      %p97 = scmp.eq.s32.totalorder %s28, 1
      %p98 = por %p96, %p97
      %p100 = scmp.ne.s32.totalorder %s85, %s99
      %p101 = scmp.eq.s32.totalorder %s28, 0
      %p102 = por %p100, %p101
      %s104 = sadd.s32 %s103, 1
      %p107 = scmp.eq.s32.totalorder %s22, 1
      %p108 = scmp.ne.s32.totalorder %s103, %s105
      %p109 = scmp.eq.s32.totalorder %s22, 0
      %p110 = por %p108, %p109
      %p111 = scmp.ne.s32.totalorder %s103, %s105
      %p112 = scmp.eq.s32.totalorder %s27, 1
      %p113 = por %p111, %p112
      %p114 = scmp.ne.s32.totalorder %s105, %s106
      %p115 = scmp.eq.s32.totalorder %s27, 0
      %p116 = por %p114, %p115
      %p117 = scmp.ne.s32.totalorder %s105, %s106
      %p118 = scmp.eq.s32.totalorder %s28, 1
      %p119 = por %p117, %p118
      %p121 = scmp.ne.s32.totalorder %s106, %s120
      %p122 = scmp.eq.s32.totalorder %s28, 0
      %p123 = por %p121, %p122
      %s125 = sadd.s32 %s124, 1
      %p128 = scmp.eq.s32.totalorder %s22, 1
      %p129 = scmp.ne.s32.totalorder %s124, %s126
      %p130 = scmp.eq.s32.totalorder %s22, 0
      %p131 = por %p129, %p130
      %p132 = scmp.ne.s32.totalorder %s124, %s126
      %p133 = scmp.eq.s32.totalorder %s27, 1
      %p134 = por %p132, %p133
      %p135 = scmp.ne.s32.totalorder %s126, %s127
      %p136 = scmp.eq.s32.totalorder %s27, 0
      %p137 = por %p135, %p136
      %p138 = scmp.ne.s32.totalorder %s126, %s127
      %p139 = scmp.eq.s32.totalorder %s28, 1
      %p140 = por %p138, %p139
      %p142 = scmp.ne.s32.totalorder %s127, %s141
      %p143 = scmp.eq.s32.totalorder %s28, 0
      %p144 = por %p142, %p143
      %s146 = sadd.s32 %s145, 1
      %p149 = scmp.eq.s32.totalorder %s22, 1
      %p150 = scmp.ne.s32.totalorder %s145, %s147
      %p151 = scmp.eq.s32.totalorder %s22, 0
      %p152 = por %p150, %p151
      %p153 = scmp.ne.s32.totalorder %s145, %s147
      %p154 = scmp.eq.s32.totalorder %s27, 1
      %p155 = por %p153, %p154
      %p156 = scmp.ne.s32.totalorder %s147, %s148
      %p157 = scmp.eq.s32.totalorder %s27, 0
      %p158 = por %p156, %p157
      %p159 = scmp.ne.s32.totalorder %s147, %s148
      %p160 = scmp.eq.s32.totalorder %s28, 1
      %p161 = por %p159, %p160
      %p163 = scmp.ne.s32.totalorder %s148, %s162
      %p164 = scmp.eq.s32.totalorder %s28, 0
      %p165 = por %p163, %p164
      %s167 = sadd.s32 %s166, 1
      %p170 = scmp.eq.s32.totalorder %s22, 1
      %p171 = scmp.ne.s32.totalorder %s166, %s168
      %p172 = scmp.eq.s32.totalorder %s22, 0
      %p173 = por %p171, %p172
      %p174 = scmp.ne.s32.totalorder %s166, %s168
      %p175 = scmp.eq.s32.totalorder %s27, 1
      %p176 = por %p174, %p175
      %p177 = scmp.ne.s32.totalorder %s168, %s169
      %p178 = scmp.eq.s32.totalorder %s27, 0
      %p179 = por %p177, %p178
      %p180 = scmp.ne.s32.totalorder %s168, %s169
      %p181 = scmp.eq.s32.totalorder %s28, 1
      %p182 = por %p180, %p181
      %p184 = scmp.ne.s32.totalorder %s169, %s183
      %p185 = scmp.eq.s32.totalorder %s28, 0
      %p186 = por %p184, %p185
      %s188 = sadd.s32 %s187, 1
      %p191 = scmp.eq.s32.totalorder %s22, 1
      %p192 = scmp.ne.s32.totalorder %s187, %s189
      %p193 = scmp.eq.s32.totalorder %s22, 0
      %p194 = por %p192, %p193
      %p195 = scmp.ne.s32.totalorder %s187, %s189
      %p196 = scmp.eq.s32.totalorder %s27, 1
      %p197 = por %p195, %p196
      %p198 = scmp.ne.s32.totalorder %s189, %s190
      %p199 = scmp.eq.s32.totalorder %s27, 0
      %p200 = por %p198, %p199
      %p201 = scmp.ne.s32.totalorder %s189, %s190
      %p202 = scmp.eq.s32.totalorder %s28, 1
      %p203 = por %p201, %p202
      %p205 = scmp.ne.s32.totalorder %s190, %s204
      %p206 = scmp.eq.s32.totalorder %s28, 0
      %p207 = por %p205, %p206
      %s209 = sadd.s32 %s208, 1
      %p212 = scmp.eq.s32.totalorder %s22, 1
      %p213 = scmp.ne.s32.totalorder %s208, %s210
      %p214 = scmp.eq.s32.totalorder %s22, 0
      %p215 = por %p213, %p214
      %p216 = scmp.ne.s32.totalorder %s208, %s210
      %p217 = scmp.eq.s32.totalorder %s27, 1
      %p218 = por %p216, %p217
      %p219 = scmp.ne.s32.totalorder %s210, %s211
      %p220 = scmp.eq.s32.totalorder %s27, 0
      %p221 = por %p219, %p220
      %p222 = scmp.ne.s32.totalorder %s210, %s211
      %p223 = scmp.eq.s32.totalorder %s28, 1
      %p224 = por %p222, %p223
      %p226 = scmp.ne.s32.totalorder %s211, %s225
      %p227 = scmp.eq.s32.totalorder %s28, 0
      %p228 = por %p226, %p227
      %s230 = sadd.s32 %s229, 1
      %p233 = scmp.eq.s32.totalorder %s22, 1
      %p234 = scmp.ne.s32.totalorder %s229, %s231
      %p235 = scmp.eq.s32.totalorder %s22, 0
      %p236 = por %p234, %p235
      %p237 = scmp.ne.s32.totalorder %s229, %s231
      %p238 = scmp.eq.s32.totalorder %s27, 1
      %p239 = por %p237, %p238
      %p240 = scmp.ne.s32.totalorder %s231, %s232
      %p241 = scmp.eq.s32.totalorder %s27, 0
      %p242 = por %p240, %p241
      %p243 = scmp.ne.s32.totalorder %s231, %s232
      %p244 = scmp.eq.s32.totalorder %s28, 1
      %p245 = por %p243, %p244
      %p247 = scmp.ne.s32.totalorder %s232, %s246
      %p248 = scmp.eq.s32.totalorder %s28, 0
      %p249 = por %p247, %p248
      %s251 = sadd.s32 %s250, 1
      %p254 = scmp.eq.s32.totalorder %s22, 1
      %p255 = scmp.ne.s32.totalorder %s250, %s252
      %p256 = scmp.eq.s32.totalorder %s22, 0
      %p257 = por %p255, %p256
      %p258 = scmp.ne.s32.totalorder %s250, %s252
      %p259 = scmp.eq.s32.totalorder %s27, 1
      %p260 = por %p258, %p259
      %p261 = scmp.ne.s32.totalorder %s252, %s253
      %p262 = scmp.eq.s32.totalorder %s27, 0
      %p263 = por %p261, %p262
      %p264 = scmp.ne.s32.totalorder %s252, %s253
      %p265 = scmp.eq.s32.totalorder %s28, 1
      %p266 = por %p264, %p265
      %p268 = scmp.ne.s32.totalorder %s253, %s267
      %p269 = scmp.eq.s32.totalorder %s28, 0
      %p270 = por %p268, %p269
      %s272 = sadd.s32 %s271, 1
      %p275 = scmp.eq.s32.totalorder %s22, 1
      %p276 = scmp.ne.s32.totalorder %s271, %s273
      %p277 = scmp.eq.s32.totalorder %s22, 0
      %p278 = por %p276, %p277
      %p279 = scmp.ne.s32.totalorder %s271, %s273
      %p280 = scmp.eq.s32.totalorder %s27, 1
      %p281 = por %p279, %p280
      %p282 = scmp.ne.s32.totalorder %s273, %s274
      %p283 = scmp.eq.s32.totalorder %s27, 0
      %p284 = por %p282, %p283
      %p285 = scmp.ne.s32.totalorder %s273, %s274
      %p286 = scmp.eq.s32.totalorder %s28, 1
      %p287 = por %p285, %p286
      %p289 = scmp.ne.s32.totalorder %s274, %s288
      %p290 = scmp.eq.s32.totalorder %s28, 0
      %p291 = por %p289, %p290
      %s292 = ssub.s32 %s22, %s29
      %p293 = scmp.eq.s32.totalorder %s292, 0
      %s295 = sadd.s32 %s294, 1
      %s296 = scalar_select %p293, %s294, %s295
      %p299 = pneg %p293
      %p300 = scmp.eq.s32.totalorder %s22, 1
      %p301 = por %p299, %p300
      %p302 = scmp.ne.s32.totalorder %s294, %s297
      %p303 = scmp.eq.s32.totalorder %s22, 0
      %p304 = por %p302, %p303
      %p305 = scmp.ne.s32.totalorder %s294, %s297
      %p306 = scmp.eq.s32.totalorder %s27, 1
      %p307 = por %p305, %p306
      %p308 = scmp.ne.s32.totalorder %s297, %s298
      %p309 = scmp.eq.s32.totalorder %s27, 0
      %p310 = por %p308, %p309
      %p311 = scmp.ne.s32.totalorder %s297, %s298
      %p312 = scmp.eq.s32.totalorder %s28, 1
      %p313 = por %p311, %p312
      %p315 = scmp.ne.s32.totalorder %s298, %s314
      %p316 = scmp.eq.s32.totalorder %s28, 0
      %p317 = por %p315, %p316
      %p318 = scmp.le.s32.totalorder 1, %s22
      %p319 = scmp.lt.s32.totalorder %s22, 3
      %p320 = pnand %p318, %p319
      %p321 = pneg %p320
      // Predicated region
      $region9: #{tpu_custom_call.1} parent=5 // pred_check
        _
      $region10: #{tpu_custom_call.1} parent=5 // pred_check_branch
        %323 = sbr.rel (%p320) target = $region12
      $region11: #{tpu_custom_call.1} parent=5 // pred_region
        %s324 = ssub.s32 %s22, 1
        // Predicated region
        $region13: #{tpu_custom_call.1} parent=11 // pred_check
          %p325 = pneg %p95
        $region14: #{tpu_custom_call.1} parent=11 // pred_check_branch
          %327 = sbr.rel (%p325) target = $region16
        $region15: #{tpu_custom_call.1} parent=11 // pred_region
          _
        $region16: #{tpu_custom_call.1} parent=11 // pred_fallthru
          _
        // Predicated region
        $region17: #{tpu_custom_call.1} parent=11 // pred_check
          %p328 = pneg %p116
        $region18: #{tpu_custom_call.1} parent=11 // pred_check_branch
          %330 = sbr.rel (%p328) target = $region20
        $region19: #{tpu_custom_call.1} parent=11 // pred_region
          _
        $region20: #{tpu_custom_call.1} parent=11 // pred_fallthru
          _
        // Predicated region
        $region21: #{tpu_custom_call.1} parent=11 // pred_check
          %p331 = pneg %p137
        $region22: #{tpu_custom_call.1} parent=11 // pred_check_branch
          %333 = sbr.rel (%p331) target = $region24
        $region23: #{tpu_custom_call.1} parent=11 // pred_region
          _
        $region24: #{tpu_custom_call.1} parent=11 // pred_fallthru
          _
        // Predicated region
        $region25: #{tpu_custom_call.1} parent=11 // pred_check
          %p334 = pneg %p158
        $region26: #{tpu_custom_call.1} parent=11 // pred_check_branch
          %336 = sbr.rel (%p334) target = $region28
        $region27: #{tpu_custom_call.1} parent=11 // pred_region
          _
        $region28: #{tpu_custom_call.1} parent=11 // pred_fallthru
          _
        // Predicated region
        $region29: #{tpu_custom_call.1} parent=11 // pred_check
          %p337 = pneg %p179
        $region30: #{tpu_custom_call.1} parent=11 // pred_check_branch
          %339 = sbr.rel (%p337) target = $region32
        $region31: #{tpu_custom_call.1} parent=11 // pred_region
          _
        $region32: #{tpu_custom_call.1} parent=11 // pred_fallthru
          _
        // Predicated region
        $region33: #{tpu_custom_call.1} parent=11 // pred_check
          %p340 = pneg %p200
        $region34: #{tpu_custom_call.1} parent=11 // pred_check_branch
          %342 = sbr.rel (%p340) target = $region36
        $region35: #{tpu_custom_call.1} parent=11 // pred_region
          _
        $region36: #{tpu_custom_call.1} parent=11 // pred_fallthru
          _
        // Predicated region
        $region37: #{tpu_custom_call.1} parent=11 // pred_check
          %p343 = pneg %p221
        $region38: #{tpu_custom_call.1} parent=11 // pred_check_branch
          %345 = sbr.rel (%p343) target = $region40
        $region39: #{tpu_custom_call.1} parent=11 // pred_region
          %347 = vsyncadd [#allocation3], 0
          %s348 = sshll.u32 %s8, 4
          %s349 = int_to_ptr.hbm [resolvable:$true] %s348
          %s350 = sshll.u32 [#allocation2], 4
          %s351 = int_to_ptr.vmem [resolvable:$true] %s350
          %356 = dma.hbm_to_vmem [thread:$0]  %s349, 128, %s351, [#allocation3], 64, 64, 4
        $region40: #{tpu_custom_call.1} parent=11 // pred_fallthru
          _
        // Predicated region
        $region41: #{tpu_custom_call.1} parent=11 // pred_check
          %p357 = pneg %p242
        $region42: #{tpu_custom_call.1} parent=11 // pred_check_branch
          %359 = sbr.rel (%p357) target = $region44
        $region43: #{tpu_custom_call.1} parent=11 // pred_region
          _
        $region44: #{tpu_custom_call.1} parent=11 // pred_fallthru
          _
        // Predicated region
        $region45: #{tpu_custom_call.1} parent=11 // pred_check
          %p360 = pneg %p263
        $region46: #{tpu_custom_call.1} parent=11 // pred_check_branch
          %362 = sbr.rel (%p360) target = $region48
        $region47: #{tpu_custom_call.1} parent=11 // pred_region
          _
        $region48: #{tpu_custom_call.1} parent=11 // pred_fallthru
          _
        // Predicated region
        $region49: #{tpu_custom_call.1} parent=11 // pred_check
          %p363 = pneg %p284
        $region50: #{tpu_custom_call.1} parent=11 // pred_check_branch
          %365 = sbr.rel (%p363) target = $region52
        $region51: #{tpu_custom_call.1} parent=11 // pred_region
          _
        $region52: #{tpu_custom_call.1} parent=11 // pred_fallthru
          _
      $region12: #{tpu_custom_call.1} parent=5 // pred_fallthru
        _
      %p366 = scmp.lt.s32.totalorder %s22, 2
      // Predicated region
      $region53: #{tpu_custom_call.1} parent=5 // pred_check
        %p367 = pneg %p366
      $region54: #{tpu_custom_call.1} parent=5 // pred_check_branch
        %369 = sbr.rel (%p367) target = $region56
      $region55: #{tpu_custom_call.1} parent=5 // pred_region
        // Predicated region
        $region57: #{tpu_custom_call.1} parent=55 // pred_check
          %p370 = pneg %p42
        $region58: #{tpu_custom_call.1} parent=55 // pred_check_branch
          %372 = sbr.rel (%p370) target = $region60
        $region59: #{tpu_custom_call.1} parent=55 // pred_region
          %p373 = scmp.lt.s32.totalorder %s22, 1
          %s374 = scalar_select %p373, %s22, 1
          %s375 = smul.addr %s374, 8
          %s376 = scalar_lea.vmem %s0, %s375
        $region60: #{tpu_custom_call.1} parent=55 // pred_fallthru
          _
        // Predicated region
        $region61: #{tpu_custom_call.1} parent=55 // pred_check
          %p377 = pneg %p68
        $region62: #{tpu_custom_call.1} parent=55 // pred_check_branch
          %379 = sbr.rel (%p377) target = $region64
        $region63: #{tpu_custom_call.1} parent=55 // pred_region
          %s380 = smul.u32 2, %s22
          %p381 = scmp.lt.s32.totalorder %s380, 3
          %s382 = scalar_select %p381, %s380, 3
          %s383 = smul.addr %s382, 8
          %s384 = scalar_lea.vmem %s1, %s383
          %s385 = smul.u32 2, %s22
        $region64: #{tpu_custom_call.1} parent=55 // pred_fallthru
          _
      $region56: #{tpu_custom_call.1} parent=5 // pred_fallthru
        _
      %p386 = scmp.le.s32.totalorder 1, %s22
      %p387 = scmp.lt.s32.totalorder %s22, 3
      %p388 = pnand %p386, %p387
      %p389 = pneg %p388
      // Predicated region
      $region65: #{tpu_custom_call.1} parent=5 // pred_check
        _
      $region66: #{tpu_custom_call.1} parent=5 // pred_check_branch
        %391 = sbr.rel (%p388) target = $region68
      $region67: #{tpu_custom_call.1} parent=5 // pred_region
        %s392 = ssub.s32 %s22, 1
        // Predicated region
        $region69: #{tpu_custom_call.1} parent=67 // pred_check
          %p393 = pneg %p221
        $region70: #{tpu_custom_call.1} parent=67 // pred_check_branch
          %395 = sbr.rel (%p393) target = $region72
        $region71: #{tpu_custom_call.1} parent=67 // pred_region
          %397 = dma.done [#allocation3], 128
        $region72: #{tpu_custom_call.1} parent=67 // pred_fallthru
          _
        %p398 = scmp.lt.s32.totalorder %s27, 1
        %s399 = scalar_select %p398, %s27, 1
        %s400 = smul.addr %s399, 8
        %s401 = scalar_lea.vmem %s0, %s400
        %p402 = pneg %p48
        %p403 = pneg %p45
        %s404 = smul.u32 2, %s27
        %p405 = scmp.lt.s32.totalorder %s404, 3
        %s406 = scalar_select %p405, %s404, 3
        %s407 = smul.addr %s406, 8
        %s408 = scalar_lea.vmem %s1, %s407
        %p409 = pneg %p74
        %p410 = pneg %p71
        %p411 = pneg %p95
        %p412 = pneg %p92
        %p413 = pneg %p116
        %p414 = pneg %p113
        %p415 = pneg %p137
        %p416 = pneg %p134
        %p417 = pneg %p158
        %p418 = pneg %p155
        %p419 = pneg %p179
        %p420 = pneg %p176
        %p421 = pneg %p200
        %p422 = pneg %p197
        %p423 = pneg %p221
        %p424 = pneg %p218
        %p425 = pneg %p242
        %p426 = pneg %p239
        %p427 = pneg %p263
        %p428 = pneg %p260
        %p429 = pneg %p284
        %p430 = pneg %p281
        %p431 = pneg %p310
        %p432 = pneg %p307
        %s433 = sand.u32 %s297, 1
        %s434 = scalar_lea.sflag [#allocation4], %s433
        %s435 = sand.u32 %s297, 1
        %s436 = smul.addr %s435, 8
        %s437 = scalar_lea.vmem [#allocation5], %s436
        %p438 = scmp.lt.s32.totalorder %s27, 1
        %s439 = scalar_select %p438, %s27, 1
        %s440 = smul.addr %s439, 8
        %s441 = scalar_lea.vmem %s0, %s440
        %s442 = smul.u32 2, %s27
        %p443 = scmp.lt.s32.totalorder %s442, 3
        %s444 = scalar_select %p443, %s442, 3
        %s445 = smul.addr %s444, 8
        %s446 = scalar_lea.vmem %s1, %s445
        %s447 = smul.u32 2, %s27
        %v449 = vld [vmem:[%s441] sm:$0xff]
        %v450 = vld [vmem:[%s446] sm:$0xff]
        %v451 = vld [vmem:[%s446 + $0x8] sm:$0xff]
        %v452 = vld [vmem:[%s2] sm:$0x1]
        %v453 = vld [vmem:[%s3] sm:$0x1]
        %vm454 = vcmask 261120
        %v455 = vsel %vm454, %v449, 0.0
        %456 = vadd.xlane.f32.xlu0 %v455
        %v457 = vpop.xlane.xlu0 %456
        %v458 = vrcp.pop 32.0
        %v459 = vmul.f32 32.0, %v458
        %v460 = vsub.f32 1.0, %v459
        %v461 = vmul.f32 %v458, %v460
        %v462 = vadd.f32 %v458, %v461
        %vm463 = vweird.f32 %v458
        %v464 = vsel %vm463, %v458, %v462
        %v465 = vmul.f32 %v457, %v464
        %v466 = vsub.f32 %v449, %v465
        %v467 = vmul.f32 %v466, %v466
        %v468 = vsel %vm454, %v467, 0.0
        %469 = vadd.xlane.f32.xlu0 %v468
        %v470 = vpop.xlane.xlu0 %469
        %v471 = vmul.f32 %v470, %v464
        %v472 = vadd.f32 %v471, 1e-05
        %v473 = vrsqrt.pop %v472
        %v474 = vmul.f32 %v473, %v472
        %v475 = vmul.f32 %v474, %v473
        %v476 = vmul.f32 0.5, %v475
        %v477 = vsub.f32 1.5, %v476
        %v478 = vmul.f32 %v473, %v477
        %vm479 = vweird.f32 %v472
        %vm480 = vweird.f32 %v473
        %vm481 = vmor %vm479, %vm480
        %v482 = vsel %vm481, %v473, %v478
        %v483 = vmul.f32 %v466, %v482
        %v485 = vperm.slane %v452, 0
        %v487 = vmul.f32 %v483, %v485
        %v489 = vperm.slane %v453, 0
        %v491 = vadd.f32 %v487, %v489
        %v492 = vld [vmem:[%s4] sm:$0x1]
        %v493 = vld [vmem:[%s5] sm:$0x1]
        %vm494 = vcmask 130048
        %v495 = vsel %vm494, %v450, 0.0
        %496 = vadd.xlane.f32.xlu0 %v495
        %v497 = vpop.xlane.xlu0 %496
        %v498 = vsel %vm494, %v451, 0.0
        %499 = vadd.xlane.f32.xlu0 %v498
        %v500 = vpop.xlane.xlu0 %499
        %v501 = vrcp.pop 16.0
        %v502 = vmul.f32 16.0, %v501
        %v503 = vsub.f32 1.0, %v502
        %v504 = vmul.f32 %v501, %v503
        %v505 = vadd.f32 %v501, %v504
        %vm506 = vweird.f32 %v501
        %v507 = vsel %vm506, %v501, %v505
        %v508 = vmul.f32 %v497, %v507
        %v509 = vmul.f32 %v500, %v507
        %v510 = vsub.f32 %v450, %v508
        %v511 = vsub.f32 %v451, %v509
        %v512 = vmul.f32 %v510, %v510
        %v513 = vmul.f32 %v511, %v511
        %v514 = vsel %vm494, %v512, 0.0
        %515 = vadd.xlane.f32.xlu0 %v514
        %v516 = vpop.xlane.xlu0 %515
        %v517 = vsel %vm494, %v513, 0.0
        %518 = vadd.xlane.f32.xlu0 %v517
        %v519 = vpop.xlane.xlu0 %518
        %v520 = vmul.f32 %v516, %v507
        %v521 = vmul.f32 %v519, %v507
        %v522 = vadd.f32 %v520, 1e-05
        %v523 = vadd.f32 %v521, 1e-05
        %v524 = vrsqrt.pop %v522
        %v525 = vmul.f32 %v524, %v522
        %v526 = vmul.f32 %v525, %v524
        %v527 = vmul.f32 0.5, %v526
        %v528 = vsub.f32 1.5, %v527
        %v529 = vmul.f32 %v524, %v528
        %vm530 = vweird.f32 %v522
        %vm531 = vweird.f32 %v524
        %vm532 = vmor %vm530, %vm531
        %v533 = vsel %vm532, %v524, %v529
        %v534 = vrsqrt.pop %v523
        %v535 = vmul.f32 %v534, %v523
        %v536 = vmul.f32 %v535, %v534
        %v537 = vmul.f32 0.5, %v536
        %v538 = vsub.f32 1.5, %v537
        %v539 = vmul.f32 %v534, %v538
        %vm540 = vweird.f32 %v523
        %vm541 = vweird.f32 %v534
        %vm542 = vmor %vm540, %vm541
        %v543 = vsel %vm542, %v534, %v539
        %v544 = vmul.f32 %v510, %v533
        %v545 = vmul.f32 %v511, %v543
        %v547 = vperm.slane %v492, 0
        %v549 = vmul.f32 %v544, %v547
        %v550 = vmul.f32 %v545, %v547
        %v552 = vperm.slane %v493, 0
        %v554 = vadd.f32 %v549, %v552
        %v555 = vadd.f32 %v550, %v552
        %v556 = vpack.c.bf16 %v491, %v491
        %v557 = vpack.c.bf16 %v555, %v554
        %v558 = vld [vmem:[%s6] sm:$0xf]
        %v559 = vld [vmem:[%s6 + $0x4] sm:$0xf]
        %v560 = vld [vmem:[%s6 + $0x8] sm:$0xf]
        %v561 = vld [vmem:[%s6 + $0xc] sm:$0xf]
        %v562 = vld [vmem:[%s7] sm:$0x1]
        %v564 = vperm.slane %v562, 0
        %v570 = vunpack.c.l.b16 %v558
        %v571 = vunpack.c.l.b16 %v559
        %v572 = vunpack.c.l.b16 %v560
        %v573 = vunpack.c.l.b16 %v561
        %v574 = vpack.c.b16 %v571, %v570
        %v575 = vpack.c.b16 %v573, %v572
        %v579 = vsel %vm454, %v556, 0
        %581 = vmatpush.bf16.msra.mxu0 0
        %582 = vmatpush.bf16.msra.mxu0 0
        %583 = vmatpush.bf16.msra.mxu0 0
        %584 = vmatpush.bf16.msra.mxu0 0
        %585 = vmatpush.bf16.msra.mxu0 0
        %586 = vmatpush.bf16.msra.mxu0 0
        %587 = vmatpush.bf16.msra.mxu0 %v575
        %588 = vmatpush.bf16.msra.mxu0 %v574
        %589 = vmatmul.bf16.gmra.mxu0 %v579
        %v590 = vpop.f32.mrf.mxu0
        %v591 = vadd.f32 %v564, %v590
        %v592 = vpop.f32.mrf.mxu0
        %593 = vdwg.mxu0
        %v594 = vld [vmem:[#allocation2] sm:$0xf]
        %v595 = vld [vmem:[#allocation2 + $0x4] sm:$0xf]
        %v596 = vld [vmem:[%s9] sm:$0x1]
        %v598 = vperm.slane %v596, 0
        %v602 = vunpack.c.l.b16 %v594
        %v603 = vunpack.c.l.b16 %v595
        %v604 = vpack.c.b16 %v603, %v602
        %v607 = vsel %vm494, %v557, 0
        %609 = vmatpush.bf16.msra.mxu0 0
        %610 = vmatpush.bf16.msra.mxu0 0
        %611 = vmatpush.bf16.msra.mxu0 0
        %612 = vmatpush.bf16.msra.mxu0 0
        %613 = vmatpush.bf16.msra.mxu0 0
        %614 = vmatpush.bf16.msra.mxu0 0
        %615 = vmatpush.bf16.msra.mxu0 0
        %616 = vmatpush.bf16.msra.mxu0 %v604
        %617 = vmatmul.bf16.gmra.mxu0 %v607
        %v618 = vpop.f32.mrf.mxu0
        %v619 = vadd.f32 %v598, %v618
        %v620 = vpop.f32.mrf.mxu0
        %v621 = vadd.f32 %v598, %v620
        %622 = vdwg.mxu0
        %v623 = vld [vmem:[%s10] sm:$0xf]
        %v624 = vld [vmem:[%s10 + $0x4] sm:$0xf]
        %v625 = vld [vmem:[%s10 + $0x8] sm:$0xf]
        %v626 = vld [vmem:[%s10 + $0xc] sm:$0xf]
        %v627 = vpack.c.bf16 %v591, %v591
        %v628 = vpack.c.bf16 %v619, %v619
        %v629 = vpack.c.bf16 %v621, %v621
        %v632 = vunpack.c.l.b16 %v628
        %v633 = vunpack.c.l.b16 %v629
        %v634 = vpack.c.b16 %v633, %v632
        %vm635 = vcmask 64512
        %v637 = vsel %vm635, %v627, 0
        %v640 = vsel %vm635, %v634, 0
        %642 = vmatpush.bf16.xpose.msra.mxu0 0
        %643 = vmatpush.bf16.xpose.msra.mxu0 0
        %644 = vmatpush.bf16.xpose.msra.mxu0 0
        %645 = vmatpush.bf16.xpose.msra.mxu0 0
        %646 = vmatpush.bf16.xpose.msra.mxu0 0
        %647 = vmatpush.bf16.xpose.msra.mxu0 0
        %648 = vmatpush.bf16.xpose.msra.mxu0 0
        %649 = vmatpush.bf16.xpose.msra.mxu0 %v640
        %650 = vmatmul.bf16.gmra.mxu0 %v637
        %v651 = vpop.f32.mrf.mxu0
        %v652 = vadd.f32 0.0, %v651
        %v653 = vpop.f32.mrf.mxu0
        %654 = vdwg.mxu0
        %v655 = vsel %vm494, %v652, -inf
        %656 = vmax.xlane.f32.xlu0 %v655
        %v657 = vpop.xlane.xlu0 %656
        %v658 = vsub.f32 %v652, %v657
        %v659 = vmul.f32 %v658, 1.442695
        %v660 = vpow.pop %v659
        %v661 = vsel %vm494, %v660, 0.0
        %662 = vadd.xlane.f32.xlu0 %v661
        %v663 = vpop.xlane.xlu0 %662
        %v664 = vrcp.pop %v663
        %v665 = vmul.f32 %v660, %v664
        %v666 = vpack.c.bf16 %v665, %v665
        %667 = vrot.lane.b32.xlu0 %v634, 96
        %v668 = vpop.permute.xlu0 %667
        %v671 = vsel %vm494, %v666, 0
        %673 = vmatpush.bf16.msra.mxu0 0
        %674 = vmatpush.bf16.msra.mxu0 0
        %675 = vmatpush.bf16.msra.mxu0 0
        %676 = vmatpush.bf16.msra.mxu0 0
        %677 = vmatpush.bf16.msra.mxu0 0
        %678 = vmatpush.bf16.msra.mxu0 0
        %679 = vmatpush.bf16.msra.mxu0 0
        %680 = vmatpush.bf16.msra.mxu0 %v668
        %681 = vmatmul.bf16.gmra.mxu0 %v671
        %v682 = vpop.f32.mrf.mxu0
        %v683 = vadd.f32 0.0, %v682
        %v684 = vpop.f32.mrf.mxu0
        %685 = vdwg.mxu0
        %v686 = vpack.c.bf16 %v683, %v683
        %v688 = vunpack.c.l.b16 %v627
        %v689 = vpack.c.b16 %v688, %v688
        %690 = vrot.lane.b32.xlu0 %v689, 120
        %v691 = vpop.permute.xlu0 %690
        %692 = vrot.lane.b32.xlu0 %v634, 120
        %v693 = vpop.permute.xlu0 %692
        %v695 = vsel %vm635, %v691, 0
        %v698 = vsel %vm635, %v693, 0
        %700 = vmatpush.bf16.xpose.msra.mxu0 0
        %701 = vmatpush.bf16.xpose.msra.mxu0 0
        %702 = vmatpush.bf16.xpose.msra.mxu0 0
        %703 = vmatpush.bf16.xpose.msra.mxu0 0
        %704 = vmatpush.bf16.xpose.msra.mxu0 0
        %705 = vmatpush.bf16.xpose.msra.mxu0 0
        %706 = vmatpush.bf16.xpose.msra.mxu0 0
        %707 = vmatpush.bf16.xpose.msra.mxu0 %v698
        %708 = vmatmul.bf16.gmra.mxu0 %v695
        %v709 = vpop.f32.mrf.mxu0
        %v710 = vadd.f32 0.0, %v709
        %v711 = vpop.f32.mrf.mxu0
        %712 = vdwg.mxu0
        %v713 = vsel %vm494, %v710, -inf
        %714 = vmax.xlane.f32.xlu0 %v713
        %v715 = vpop.xlane.xlu0 %714
        %v716 = vsub.f32 %v710, %v715
        %v717 = vmul.f32 %v716, 1.442695
        %v718 = vpow.pop %v717
        %v719 = vsel %vm494, %v718, 0.0
        %720 = vadd.xlane.f32.xlu0 %v719
        %v721 = vpop.xlane.xlu0 %720
        %v722 = vrcp.pop %v721
        %v723 = vmul.f32 %v718, %v722
        %v724 = vpack.c.bf16 %v723, %v723
        %725 = vrot.lane.b32.xlu0 %v634, 88
        %v726 = vpop.permute.xlu0 %725
        %v729 = vsel %vm494, %v724, 0
        %731 = vmatpush.bf16.msra.mxu0 0
        %732 = vmatpush.bf16.msra.mxu0 0
        %733 = vmatpush.bf16.msra.mxu0 0
        %734 = vmatpush.bf16.msra.mxu0 0
        %735 = vmatpush.bf16.msra.mxu0 0
        %736 = vmatpush.bf16.msra.mxu0 0
        %737 = vmatpush.bf16.msra.mxu0 0
        %738 = vmatpush.bf16.msra.mxu0 %v726
        %739 = vmatmul.bf16.gmra.mxu0 %v729
        %v740 = vpop.f32.mrf.mxu0
        %v741 = vadd.f32 0.0, %v740
        %v742 = vpop.f32.mrf.mxu0
        %743 = vdwg.mxu0
        %v744 = vpack.c.bf16 %v741, %v741
        %v746 = vsel %vm635, %v744, 0
        %vm748 = vcmask 1043456
        %v750 = vsel %vm748, %v624, 0
        %752 = vmatpush.bf16.msra.mxu0 0
        %753 = vmatpush.bf16.msra.mxu0 0
        %754 = vmatpush.bf16.msra.mxu0 0
        %755 = vmatpush.bf16.msra.mxu0 0
        %756 = vmatpush.bf16.msra.mxu0 0
        %757 = vmatpush.bf16.msra.mxu0 0
        %758 = vmatpush.bf16.msra.mxu0 0
        %759 = vmatpush.bf16.msra.mxu0 %v750
        %760 = vmatmul.bf16.gmra.mxu0 %v746
        %v761 = vpop.f32.mrf.mxu0
        %v762 = vadd.f32 0.0, %v761
        %v763 = vpop.f32.mrf.mxu0
        %764 = vdwg.mxu0
        %v766 = vsel %vm635, %v686, 0
        %v769 = vsel %vm748, %v623, 0
        %771 = vmatpush.bf16.msra.mxu0 0
        %772 = vmatpush.bf16.msra.mxu0 0
        %773 = vmatpush.bf16.msra.mxu0 0
        %774 = vmatpush.bf16.msra.mxu0 0
        %775 = vmatpush.bf16.msra.mxu0 0
        %776 = vmatpush.bf16.msra.mxu0 0
        %777 = vmatpush.bf16.msra.mxu0 0
        %778 = vmatpush.bf16.msra.mxu0 %v769
        %779 = vmatmul.bf16.gmra.mxu0 %v766
        %v780 = vpop.f32.mrf.mxu0
        %v781 = vadd.f32 %v762, %v780
        %v782 = vpop.f32.mrf.mxu0
        %783 = vdwg.mxu0
        %784 = vrot.lane.b32.xlu0 %v689, 112
        %v785 = vpop.permute.xlu0 %784
        %786 = vrot.lane.b32.xlu0 %v634, 112
        %v787 = vpop.permute.xlu0 %786
        %v789 = vsel %vm635, %v785, 0
        %v792 = vsel %vm635, %v787, 0
        %794 = vmatpush.bf16.xpose.msra.mxu0 0
        %795 = vmatpush.bf16.xpose.msra.mxu0 0
        %796 = vmatpush.bf16.xpose.msra.mxu0 0
        %797 = vmatpush.bf16.xpose.msra.mxu0 0
        %798 = vmatpush.bf16.xpose.msra.mxu0 0
        %799 = vmatpush.bf16.xpose.msra.mxu0 0
        %800 = vmatpush.bf16.xpose.msra.mxu0 0
        %801 = vmatpush.bf16.xpose.msra.mxu0 %v792
        %802 = vmatmul.bf16.gmra.mxu0 %v789
        %v803 = vpop.f32.mrf.mxu0
        %v804 = vadd.f32 0.0, %v803
        %v805 = vpop.f32.mrf.mxu0
        %806 = vdwg.mxu0
        %v807 = vsel %vm494, %v804, -inf
        %808 = vmax.xlane.f32.xlu0 %v807
        %v809 = vpop.xlane.xlu0 %808
        %v810 = vsub.f32 %v804, %v809
        %v811 = vmul.f32 %v810, 1.442695
        %v812 = vpow.pop %v811
        %v813 = vsel %vm494, %v812, 0.0
        %814 = vadd.xlane.f32.xlu0 %v813
        %v815 = vpop.xlane.xlu0 %814
        %v816 = vrcp.pop %v815
        %v817 = vmul.f32 %v812, %v816
        %v818 = vpack.c.bf16 %v817, %v817
        %819 = vrot.lane.b32.xlu0 %v634, 80
        %v820 = vpop.permute.xlu0 %819
        %v823 = vsel %vm494, %v818, 0
        %825 = vmatpush.bf16.msra.mxu0 0
        %826 = vmatpush.bf16.msra.mxu0 0
        %827 = vmatpush.bf16.msra.mxu0 0
        %828 = vmatpush.bf16.msra.mxu0 0
        %829 = vmatpush.bf16.msra.mxu0 0
        %830 = vmatpush.bf16.msra.mxu0 0
        %831 = vmatpush.bf16.msra.mxu0 0
        %832 = vmatpush.bf16.msra.mxu0 %v820
        %833 = vmatmul.bf16.gmra.mxu0 %v823
        %v834 = vpop.f32.mrf.mxu0
        %v835 = vadd.f32 0.0, %v834
        %v836 = vpop.f32.mrf.mxu0
        %837 = vdwg.mxu0
        %v838 = vpack.c.bf16 %v835, %v835
        %v840 = vsel %vm635, %v838, 0
        %v843 = vsel %vm748, %v625, 0
        %845 = vmatpush.bf16.msra.mxu0 0
        %846 = vmatpush.bf16.msra.mxu0 0
        %847 = vmatpush.bf16.msra.mxu0 0
        %848 = vmatpush.bf16.msra.mxu0 0
        %849 = vmatpush.bf16.msra.mxu0 0
        %850 = vmatpush.bf16.msra.mxu0 0
        %851 = vmatpush.bf16.msra.mxu0 0
        %852 = vmatpush.bf16.msra.mxu0 %v843
        %853 = vmatmul.bf16.gmra.mxu0 %v840
        %v854 = vpop.f32.mrf.mxu0
        %v855 = vadd.f32 0.0, %v854
        %v856 = vpop.f32.mrf.mxu0
        %857 = vdwg.mxu0
        %v858 = vadd.f32 %v781, %v855
        %859 = vrot.lane.b32.xlu0 %v689, 104
        %v860 = vpop.permute.xlu0 %859
        %861 = vrot.lane.b32.xlu0 %v634, 104
        %v862 = vpop.permute.xlu0 %861
        %v864 = vsel %vm635, %v860, 0
        %v867 = vsel %vm635, %v862, 0
        %869 = vmatpush.bf16.xpose.msra.mxu0 0
        %870 = vmatpush.bf16.xpose.msra.mxu0 0
        %871 = vmatpush.bf16.xpose.msra.mxu0 0
        %872 = vmatpush.bf16.xpose.msra.mxu0 0
        %873 = vmatpush.bf16.xpose.msra.mxu0 0
        %874 = vmatpush.bf16.xpose.msra.mxu0 0
        %875 = vmatpush.bf16.xpose.msra.mxu0 0
        %876 = vmatpush.bf16.xpose.msra.mxu0 %v867
        %877 = vmatmul.bf16.gmra.mxu0 %v864
        %v878 = vpop.f32.mrf.mxu0
        %v879 = vadd.f32 0.0, %v878
        %v880 = vpop.f32.mrf.mxu0
        %881 = vdwg.mxu0
        %v882 = vsel %vm494, %v879, -inf
        %883 = vmax.xlane.f32.xlu0 %v882
        %v884 = vpop.xlane.xlu0 %883
        %v885 = vsub.f32 %v879, %v884
        %v886 = vmul.f32 %v885, 1.442695
        %v887 = vpow.pop %v886
        %v888 = vsel %vm494, %v887, 0.0
        %889 = vadd.xlane.f32.xlu0 %v888
        %v890 = vpop.xlane.xlu0 %889
        %v891 = vrcp.pop %v890
        %v892 = vmul.f32 %v887, %v891
        %v893 = vpack.c.bf16 %v892, %v892
        %894 = vrot.lane.b32.xlu0 %v634, 72
        %v895 = vpop.permute.xlu0 %894
        %v898 = vsel %vm494, %v893, 0
        %900 = vmatpush.bf16.msra.mxu0 0
        %901 = vmatpush.bf16.msra.mxu0 0
        %902 = vmatpush.bf16.msra.mxu0 0
        %903 = vmatpush.bf16.msra.mxu0 0
        %904 = vmatpush.bf16.msra.mxu0 0
        %905 = vmatpush.bf16.msra.mxu0 0
        %906 = vmatpush.bf16.msra.mxu0 0
        %907 = vmatpush.bf16.msra.mxu0 %v895
        %908 = vmatmul.bf16.gmra.mxu0 %v898
        %v909 = vpop.f32.mrf.mxu0
        %v910 = vadd.f32 0.0, %v909
        %v911 = vpop.f32.mrf.mxu0
        %912 = vdwg.mxu0
        %v913 = vpack.c.bf16 %v910, %v910
        %v915 = vsel %vm635, %v913, 0
        %v918 = vsel %vm748, %v626, 0
        %920 = vmatpush.bf16.msra.mxu0 0
        %921 = vmatpush.bf16.msra.mxu0 0
        %922 = vmatpush.bf16.msra.mxu0 0
        %923 = vmatpush.bf16.msra.mxu0 0
        %924 = vmatpush.bf16.msra.mxu0 0
        %925 = vmatpush.bf16.msra.mxu0 0
        %926 = vmatpush.bf16.msra.mxu0 0
        %927 = vmatpush.bf16.msra.mxu0 %v918
        %928 = vmatmul.bf16.gmra.mxu0 %v915
        %v929 = vpop.f32.mrf.mxu0
        %v930 = vadd.f32 0.0, %v929
        %v931 = vpop.f32.mrf.mxu0
        %932 = vdwg.mxu0
        %v933 = vadd.f32 %v858, %v930
        %v934 = vld [vmem:[%s11] sm:$0x1]
        %v936 = vperm.slane %v934, 0
        %v938 = vadd.f32 %v933, %v936
        %939 = vst.msk [vmem:[%s437] sm:$0xff] %vm454, %v938
        %s940 = sand.u32 %s297, 1
        %s941 = scalar_lea.sflag [#allocation4], %s940
        %s942 = sand.u32 %s297, 1
        %s943 = smul.addr %s942, 8
        %s944 = scalar_lea.vmem [#allocation5], %s943
        // Predicated region
        $region73: #{tpu_custom_call.1} parent=67 // pred_check
          %p945 = pneg %p307
        $region74: #{tpu_custom_call.1} parent=67 // pred_check_branch
          %947 = sbr.rel (%p945) target = $region76
        $region75: #{tpu_custom_call.1} parent=67 // pred_region
          %949 = vsyncadd %s941, 0
          %s950 = smul.addr %s27, 8
          %s951 = scalar_lea.hbm %s12, %s950
          %s953 = sshll.u32 %s944, 4
          %s954 = int_to_ptr.vmem [resolvable:$true] %s953
          %s955 = sshll.u32 %s951, 4
          %s956 = int_to_ptr.hbm [resolvable:$true] %s955
          %958 = dma.vmem_to_hbm [thread:$0]  %s954, 128, %s956, %s941
        $region76: #{tpu_custom_call.1} parent=67 // pred_fallthru
          _
      $region68: #{tpu_custom_call.1} parent=5 // pred_fallthru
        _
      %p959 = scmp.le.s32.totalorder 2, %s22
      // Predicated region
      $region77: #{tpu_custom_call.1} parent=5 // pred_check
        %p960 = pneg %p959
      $region78: #{tpu_custom_call.1} parent=5 // pred_check_branch
        %962 = sbr.rel (%p960) target = $region80
      $region79: #{tpu_custom_call.1} parent=5 // pred_region
        %s963 = ssub.s32 %s22, 2
        // Predicated region
        $region81: #{tpu_custom_call.1} parent=79 // pred_check
          %p964 = pneg %p313
        $region82: #{tpu_custom_call.1} parent=79 // pred_check_branch
          %966 = sbr.rel (%p964) target = $region84
        $region83: #{tpu_custom_call.1} parent=79 // pred_region
          %s967 = sand.u32 %s298, 1
          %s968 = scalar_lea.sflag [#allocation4], %s967
          %s969 = sand.u32 %s298, 1
          %s970 = smul.addr %s969, 8
          %s971 = scalar_lea.vmem [#allocation5], %s970
          %973 = dma.done %s968, 128
        $region84: #{tpu_custom_call.1} parent=79 // pred_fallthru
          _
      $region80: #{tpu_custom_call.1} parent=5 // pred_fallthru
        _
    $region6: #{tpu_custom_call.1} parent=1 // loop_footer
      %s26 = sadd.s32 1, %s22
    $region7: #{tpu_custom_call.1} parent=1 // loop_footer_branch
      %21 = sbr.rel target = $region3
    $region8: #{tpu_custom_call.1} parent=1 // loop_exit
      _
    %974 = vsyncpa [#allocation3], 1
    %s975 = scalar_lea.sflag [#allocation3], 1
    %976 = vsyncpa %s975, 1
    %977 = vsyncpa [#allocation4], 1
    %s978 = scalar_lea.sflag [#allocation4], 1
    %979 = vsyncpa %s978, 1

</llo_original>
